<compile_context>
chip_gen: v7x
topology: tpu7x:2x2x1
jax: 0.10.0
libtpu: 0.0.40
codegen_flags: <defaults>
</compile_context>

<pallas_src>
import functools
import math

import jax
import jax.numpy as jnp
from jax.experimental import pallas as pl
from jax.experimental.pallas import tpu as pltpu


# ----------------------------------------------------------------------------
# Text geometry / synthetic ink (shared by the kernel and the pure-JAX ref).
# ----------------------------------------------------------------------------
_N_SENTENCES = 16     # len(sentences) in the original module
_FONT_SIZE = 13
_LINE_STEP = 7.8


def _text_band_rows(lines: int) -> int:
    """Number of leading image rows covered by any text line."""
    n_lines = min(int(lines), _N_SENTENCES)
    if n_lines <= 0:
        return 0
    # Consecutive line bands [i*7.8, i*7.8 + 13) overlap (7.8 < 13), so their
    # union over integer rows is a single prefix of rows.
    return int(math.ceil((n_lines - 1) * _LINE_STEP + _FONT_SIZE))


def _ink_mask(row, pcol):
    """Deterministic per-pixel 'ink' pattern (~31% coverage). i32 in, bool out."""
    h = row * 131 + pcol * 71
    h = h ^ (h >> 3)
    return (h & 15) < 5


def _lane_to_pixel_col(lane, channels: int, num_lanes: int):
    """pixel column = lane // channels for the channel-interleaved u8 layout."""
    if channels == 1:
        return lane
    if channels & (channels - 1) == 0:                 # power of two
        return lane >> (channels.bit_length() - 1)
    if channels == 3 and num_lanes <= 49152:
        # Exact //3 via magic multiply: (l * 43691) >> 17 == l // 3 for
        # 0 <= l <= 49151, no i32 overflow.
        return (lane * 43691) >> 17
    # TODO(synk): generic exact integer-division path; the float fallback is
    # exact for the fractional margins that occur here.
    return (lane.astype(jnp.float32) * (1.0 / channels) + 0.25).astype(jnp.int32)


# ----------------------------------------------------------------------------
# Pallas kernel: composite white binary-alpha text over the image, uint8 I/O.
# The alpha is generated in-kernel (iota + integer hash), so the kernel has a
# single HBM input (the image) and a single HBM output.
# ----------------------------------------------------------------------------
def _paint_kernel(im_ref, out_ref, *, rows_per_block, band_rows, channels,
                  num_lanes):
    # im_ref / out_ref : (rows, W*C) uint8, channel-interleaved.
    shape = im_ref.shape
    row0 = pl.program_id(0) * rows_per_block
    row = row0 + jax.lax.broadcasted_iota(jnp.int32, shape, 0)     # global row
    lane = jax.lax.broadcasted_iota(jnp.int32, shape, 1)           # 0..W*C-1
    pcol = _lane_to_pixel_col(lane, channels, num_lanes)           # pixel col

    # Per-pixel text coverage (identical for the C channels of a pixel).
    text = (row < band_rows) & _ink_mask(row, pcol)

    # Compute the select in 32-bit (robust layouts), store back as uint8.
    # out = 255 where text else image  (PIL alpha_composite, white src,
    # binary src alpha, opaque dst).
    im = im_ref[...].astype(jnp.int32)
    out_ref[...] = jnp.where(text, 255, im).astype(jnp.uint8)


# ----------------------------------------------------------------------------
# Tiling policy.
# ----------------------------------------------------------------------------
_TARGET_TILE_BYTES = 4 << 20   # ~4 MiB per pipeline buffer (v6e/v7x knee)
_MAX_TILE_BYTES = 5 << 20      # clamp: 2 arrays x 2 buffers x 5 MiB = 20 MiB
_VMEM_LIMIT_BYTES = 32 << 20   # explicit scoped-VMEM limit (safe on v5e/v6e/v7x)


def _round_up(x: int, m: int) -> int:
    return -(-x // m) * m


def _pick_row_tile(H: int, WC: int, row_tile) -> int:
    if row_tile is not None:
        rows = min(int(row_tile), H)
    else:
        rows = max(32, (_TARGET_TILE_BYTES // max(WC, 1)) // 32 * 32)
        if H >= 64:
            # Keep >= ~2-4 grid steps so a v7x dual-TC chip shards the
            # "parallel" axis and DMA/compute overlap exists even for images
            # that would otherwise fit a single block.
            rows = min(rows, _round_up(pl.cdiv(H, 4), 32))
    # VMEM safety clamp (also protects user-supplied row_tile on v5e).
    rows = min(rows, max(32, (_MAX_TILE_BYTES // max(WC, 1)) // 32 * 32))
    if rows >= H:
        return H
    return max(32, (rows // 32) * 32)   # keep 8-bit (32, 128) tiling legal


# ----------------------------------------------------------------------------
# Wrapper.
# ----------------------------------------------------------------------------
def paint_pallas(im_hwc_u8: jnp.ndarray, lines: int, *, row_tile=None,
                 donate_image: bool = False) -> jnp.ndarray:
    """Paint deterministic synthetic 'text' over a uint8 HWC image."""
    H, W, C = im_hwc_u8.shape
    WC = W * C
    im2d = im_hwc_u8.reshape(H, WC)      # free view of the contiguous buffer

    rows = _pick_row_tile(H, WC, row_tile)
    band_rows = _text_band_rows(lines)

    kernel = functools.partial(
        _paint_kernel, rows_per_block=rows, band_rows=band_rows,
        channels=C, num_lanes=WC)

    out2d = pl.pallas_call(
        kernel,
        out_shape=jax.ShapeDtypeStruct((H, WC), jnp.uint8),
        grid=(pl.cdiv(H, rows),),
        in_specs=[pl.BlockSpec((rows, WC), lambda i: (i, 0))],
        out_specs=pl.BlockSpec((rows, WC), lambda i: (i, 0)),
        input_output_aliases={0: 0} if donate_image else {},
        compiler_params=pltpu.CompilerParams(
            dimension_semantics=("parallel",),
            vmem_limit_bytes=_VMEM_LIMIT_BYTES),
    )(im2d)

    return out2d.reshape(H, W, C)


# ----------------------------------------------------------------------------
# Pure-JAX reference for the synthetic alpha mask (same shared formula).
# ----------------------------------------------------------------------------
def make_text_alpha_mask_ref(H: int, W: int, lines: int) -> jnp.ndarray:
    row = jnp.arange(H, dtype=jnp.int32)[:, None]
    pcol = jnp.arange(W, dtype=jnp.int32)[None, :]
    return (row < _text_band_rows(lines)) & _ink_mask(row, pcol)   # (H, W) bool


# ----------------------------------------------------------------------------
# Painting module: mirrors the PyTorch module's forward semantics.
# ----------------------------------------------------------------------------
class Painting:
    def __init__(self, lines: int, row_tile=None):
        self.lines = int(lines)
        self.row_tile = row_tile
        self._fn = jax.jit(
            lambda im: paint_pallas(im, self.lines, row_tile=self.row_tile))

    def __call__(self, noised_and_cover):
        # noised_and_cover[0] : (H, W, 3) uint8 image (like the numpy array
        # PIL consumes in the original code); only element 0 is modified.
        noised_and_cover[0] = self._fn(noised_and_cover[0])
        return noised_and_cover


if __name__ == "__main__":
    key = jax.random.PRNGKey(0)
    k_img, k_cov = jax.random.split(key)

    H, W, C = 96, 128, 3   # W*C = 384 = 3*128 -> lane-dense blocks
    noised = jax.random.randint(k_img, (H, W, C), 0, 256,
                                dtype=jnp.int32).astype(jnp.uint8)
    cover = jax.random.randint(k_cov, (H, W, C), 0, 256,
                               dtype=jnp.int32).astype(jnp.uint8)

    # Default policy: H=96 >= 64 -> 32-row tiles -> 3-step pipelined grid.
    painter = Painting(lines=4)
    result = painter([noised, cover])
    out = jax.block_until_ready(result[0])

    # Pure-JAX reference with the same deterministic synthetic alpha.
    mask = make_text_alpha_mask_ref(H, W, lines=4)                 # (H, W) bool
    ref = jnp.where(mask[:, :, None], jnp.uint8(255), noised)

    assert out.shape == (H, W, C) and out.dtype == jnp.uint8
    assert bool(jnp.all(out == ref))
    assert bool(jnp.all(result[1] == cover))   # cover is untouched

    print("KERNEL_OK")
</pallas_src>

<mosaic_0001>
module attributes {stable_mosaic.version = 11 : i64} {
  func.func @_paint_kernel(%arg0: i32, %arg1: memref<32x384xi8, #tpu.memory_space<vmem>>, %arg2: memref<32x384xi8, #tpu.memory_space<vmem>>) attributes {dimension_semantics = [#tpu.dimension_semantics<parallel>], iteration_bounds = array<i64: 3>, scalar_prefetch = 0 : i64, scratch_operands = 0 : i64, tpu.core_type = #tpu.core_type<tc>, window_params = [{transform_indices = @transform_0, window_bounds = array<i64: 32, 384>}, {transform_indices = @transform_1, window_bounds = array<i64: 32, 384>}]} {
    %c32_i32 = arith.constant 32 : i32
    %0 = arith.muli %arg0, %c32_i32 : i32
    %1 = tpu.iota {dimensions = array<i32: 0>} : vector<32x384xi32>
    %2 = vector.broadcast %0 : i32 to vector<32x384xi32>
    %3 = arith.addi %2, %1 : vector<32x384xi32>
    %4 = tpu.iota {dimensions = array<i32: 1>} : vector<32x384xi32>
    %c43691_i32 = arith.constant 43691 : i32
    %5 = vector.broadcast %c43691_i32 : i32 to vector<32x384xi32>
    %6 = arith.muli %4, %5 : vector<32x384xi32>
    %c17_i32 = arith.constant 17 : i32
    %7 = vector.broadcast %c17_i32 : i32 to vector<32x384xi32>
    %8 = arith.shrsi %6, %7 : vector<32x384xi32>
    %c37_i32 = arith.constant 37 : i32
    %9 = vector.broadcast %c37_i32 : i32 to vector<32x384xi32>
    %10 = arith.cmpi slt, %3, %9 : vector<32x384xi32>
    %c131_i32 = arith.constant 131 : i32
    %11 = vector.broadcast %c131_i32 : i32 to vector<32x384xi32>
    %12 = arith.muli %3, %11 : vector<32x384xi32>
    %c71_i32 = arith.constant 71 : i32
    %13 = vector.broadcast %c71_i32 : i32 to vector<32x384xi32>
    %14 = arith.muli %8, %13 : vector<32x384xi32>
    %15 = arith.addi %12, %14 : vector<32x384xi32>
    %c3_i32 = arith.constant 3 : i32
    %16 = vector.broadcast %c3_i32 : i32 to vector<32x384xi32>
    %17 = arith.shrsi %15, %16 : vector<32x384xi32>
    %18 = arith.xori %15, %17 : vector<32x384xi32>
    %c15_i32 = arith.constant 15 : i32
    %19 = vector.broadcast %c15_i32 : i32 to vector<32x384xi32>
    %20 = arith.andi %18, %19 : vector<32x384xi32>
    %c5_i32 = arith.constant 5 : i32
    %21 = vector.broadcast %c5_i32 : i32 to vector<32x384xi32>
    %22 = arith.cmpi slt, %20, %21 : vector<32x384xi32>
    %23 = arith.andi %10, %22 : vector<32x384xi1>
    %c0 = arith.constant 0 : index
    %c0_0 = arith.constant 0 : index
    %24 = vector.load %arg1[%c0, %c0_0] : memref<32x384xi8, #tpu.memory_space<vmem>>, vector<32x384xi8>
    %25 = arith.extui %24 : vector<32x384xi8> to vector<32x384xi32>
    %c255_i32 = arith.constant 255 : i32
    %26 = vector.broadcast %c255_i32 : i32 to vector<32x384xi32>
    %27 = arith.select %23, %26, %25 : vector<32x384xi1>, vector<32x384xi32>
    %28 = arith.trunci %27 : vector<32x384xi32> to vector<32x384xi8>
    %c0_1 = arith.constant 0 : index
    %c0_2 = arith.constant 0 : index
    %29 = vector.load %arg2[%c0_1, %c0_2] : memref<32x384xi8, #tpu.memory_space<vmem>>, vector<32x384xi8>
    tpu.vector_store %arg2[%c0_1, %c0_2], %28 {strides = array<i32>} : memref<32x384xi8, #tpu.memory_space<vmem>>, vector<32x384xi8>,
    return
  }
  func.func @transform_0(%arg0: i32) -> (i32, i32) {
    %c0_i32 = arith.constant 0 : i32
    %c0_i32_0 = arith.constant 0 : i32
    return %arg0, %c0_i32 : i32, i32
  }
  func.func @transform_1(%arg0: i32) -> (i32, i32) {
    %c0_i32 = arith.constant 0 : i32
    %c0_i32_0 = arith.constant 0 : i32
    return %arg0, %c0_i32 : i32, i32
  }
}

</mosaic_0001>

<llo_original>
// kernel: _lambda_.1
$region0: #{_lambda_.1}
  #allocation0 [shape = 'u32[]', space=smem, size = 0x4, offset = 0x4, fixed_abs, tag = 'smem constant byte address 0x4 - core index']
  #allocation1 [shape = 'u32[144,128]{1,0:T(1,128)}', space=vmem, size = 0x12000, scoped, tag = 'internal scratch']
  %s0 = inlined_call_operand.vmem [shape: u8[96,384], index: 0, kind: input, shape index: {}]
  %s1 = inlined_call_operand.vmem [shape: u8[96,384], index: 1, kind: output, shape index: {}]
  %s2 = sld [smem:[#allocation0]]
  $region37: #{_lambda_.1} parent=0
    _
  %s4 = ssub.s32 1, %s2
  %s5 = scalar_select 0, %s4, %s2
  loop: start=0, step=1, limit=5
  $region2: #{_lambda_.1} parent=0 // loop_pre_header
    _
  $region3: #{_lambda_.1} parent=0 // loop_header
    %s7 = sphi 0, %s11
    %p8 = scmp.ge.s32.totalorder %s7, 5
    %s17 = sphi 0, %s19
    %s20 = sphi 0, %s17
    %s21 = sphi 0, %s20
    %s37 = sphi 0, %s21
    %s43 = sphi 0, %s45
    %s46 = sphi 0, %s43
    %s47 = sphi 0, %s46
    %s63 = sphi 0, %s47
  $region4: #{_lambda_.1} parent=0 // loop_header_branch
    %10 = sbr.rel (%p8) target = $region8
  $region5: #{_lambda_.1} parent=0 // loop_body
    %s12 = ssub.s32 %s7, 1
    %s13 = ssub.s32 %s7, 2
    %s14 = sadd.s32 %s7, 1
    %s15 = ssub.s32 %s7, %s14
    %p16 = scmp.eq.s32.totalorder %s15, 0
    %s18 = sadd.s32 %s17, 1
    %s19 = scalar_select %p16, %s17, %s18
    %p22 = pneg %p16
    %p23 = scmp.eq.s32.totalorder %s7, 2
    %p24 = por %p22, %p23
    %p25 = scmp.ne.s32.totalorder %s17, %s20
    %p26 = scmp.eq.s32.totalorder %s7, 0
    %p27 = por %p25, %p26
    %p28 = scmp.ne.s32.totalorder %s17, %s20
    %p29 = scmp.eq.s32.totalorder %s12, 2
    %p30 = por %p28, %p29
    %p31 = scmp.ne.s32.totalorder %s20, %s21
    %p32 = scmp.eq.s32.totalorder %s12, 0
    %p33 = por %p31, %p32
    %p34 = scmp.ne.s32.totalorder %s20, %s21
    %p35 = scmp.eq.s32.totalorder %s13, 2
    %p36 = por %p34, %p35
    %p38 = scmp.ne.s32.totalorder %s21, %s37
    %p39 = scmp.eq.s32.totalorder %s13, 0
    %p40 = por %p38, %p39
    %s41 = ssub.s32 %s7, %s14
    %p42 = scmp.eq.s32.totalorder %s41, 0
    %s44 = sadd.s32 %s43, 1
    %s45 = scalar_select %p42, %s43, %s44
    %p48 = pneg %p42
    %p49 = scmp.eq.s32.totalorder %s7, 2
    %p50 = por %p48, %p49
    %p51 = scmp.ne.s32.totalorder %s43, %s46
    %p52 = scmp.eq.s32.totalorder %s7, 0
    %p53 = por %p51, %p52
    %p54 = scmp.ne.s32.totalorder %s43, %s46
    %p55 = scmp.eq.s32.totalorder %s12, 2
    %p56 = por %p54, %p55
    %p57 = scmp.ne.s32.totalorder %s46, %s47
    %p58 = scmp.eq.s32.totalorder %s12, 0
    %p59 = por %p57, %p58
    %p60 = scmp.ne.s32.totalorder %s46, %s47
    %p61 = scmp.eq.s32.totalorder %s13, 2
    %p62 = por %p60, %p61
    %p64 = scmp.ne.s32.totalorder %s47, %s63
    %p65 = scmp.eq.s32.totalorder %s13, 0
    %p66 = por %p64, %p65
    %p67 = scmp.le.s32.totalorder 1, %s7
    %p68 = scmp.lt.s32.totalorder %s7, 4
    %p69 = pnand %p67, %p68
    %p70 = pneg %p69
    // Predicated region
    $region9: #{_lambda_.1} parent=5 // pred_check
      _
    $region10: #{_lambda_.1} parent=5 // pred_check_branch
      %72 = sbr.rel (%p69) target = $region12
    $region11: #{_lambda_.1} parent=5 // pred_region
      %s73 = ssub.s32 %s7, 1
    $region12: #{_lambda_.1} parent=5 // pred_fallthru
      _
    %p74 = scmp.lt.s32.totalorder %s7, 3
    // Predicated region
    $region13: #{_lambda_.1} parent=5 // pred_check
      %p75 = pneg %p74
    $region14: #{_lambda_.1} parent=5 // pred_check_branch
      %77 = sbr.rel (%p75) target = $region16
    $region15: #{_lambda_.1} parent=5 // pred_region
      // Predicated region
      $region17: #{_lambda_.1} parent=15 // pred_check
        %p78 = pneg %p27
      $region18: #{_lambda_.1} parent=15 // pred_check_branch
        %80 = sbr.rel (%p78) target = $region20
      $region19: #{_lambda_.1} parent=15 // pred_region
        %p81 = scmp.lt.s32.totalorder %s7, 2
        %s82 = scalar_select %p81, %s7, 2
        %s83 = smul.addr %s82, 3
        %s84 = smul.addr %s83, 8
        %s85 = scalar_lea.vmem %s0, %s84
      $region20: #{_lambda_.1} parent=15 // pred_fallthru
        _
    $region16: #{_lambda_.1} parent=5 // pred_fallthru
      _
    %p86 = scmp.le.s32.totalorder 1, %s7
    %p87 = scmp.lt.s32.totalorder %s7, 4
    %p88 = pnand %p86, %p87
    %p89 = pneg %p88
    // Predicated region
    $region21: #{_lambda_.1} parent=5 // pred_check
      _
    $region22: #{_lambda_.1} parent=5 // pred_check_branch
      %91 = sbr.rel (%p88) target = $region24
    $region23: #{_lambda_.1} parent=5 // pred_region
      %s92 = ssub.s32 %s7, 1
      %p93 = scmp.lt.s32.totalorder %s12, 2
      %s94 = scalar_select %p93, %s12, 2
      %s95 = smul.addr %s94, 3
      %s96 = smul.addr %s95, 8
      %s97 = scalar_lea.vmem %s0, %s96
      %p98 = pneg %p33
      %p99 = pneg %p30
      %p100 = pneg %p59
      %p101 = pneg %p56
      %s102 = smul.u32 4, %s12
      %p103 = scmp.lt.s32.totalorder %s102, 11
      %s104 = scalar_select %p103, %s102, 11
      %s105 = smul.addr %s104, 3
      %s106 = smul.addr %s105, 2
      %s107 = scalar_lea.vmem %s1, %s106
      %p108 = scmp.lt.s32.totalorder %s12, 2
      %s109 = scalar_select %p108, %s12, 2
      %s110 = smul.addr %s109, 3
      %s111 = smul.addr %s110, 8
      %s112 = scalar_lea.vmem %s0, %s111
      %s113 = smul.u32 4, %s12
      %p114 = scmp.lt.s32.totalorder %s113, 11
      %s115 = scalar_select %p114, %s113, 11
      %s116 = smul.addr %s115, 3
      %s117 = smul.addr %s116, 2
      %s118 = scalar_lea.vmem %s1, %s117
      %s119 = smul.u32 4, %s12
      %s120 = smul.u32 %s12, 32
      %v121 = vlaneseq
      %v122 = vshrl.u32 %v121, 7
      %v123 = vadd.s32 %v122, 8
      %v124 = vadd.s32 %v122, 16
      %v125 = vadd.s32 %v122, 24
      %v126 = vstv %s120
      %v127 = vadd.s32 %v126, %v122
      %v128 = vadd.s32 %v126, %v123
      %v129 = vadd.s32 %v126, %v124
      %v130 = vadd.s32 %v126, %v125
      %v131 = vlaneseq
      %v132 = vand.u32 %v131, 127
      %v133 = vadd.s32 %v132, 128
      %v134 = vadd.s32 %v132, 256
      %v135 = vmul.u32 %v132, 43691
      %v136 = vmul.u32 %v133, 43691
      %v137 = vmul.u32 %v134, 43691
      %v138 = vshra.s32 %v135, 17
      %v139 = vshra.s32 %v136, 17
      %v140 = vshra.s32 %v137, 17
      %vm141 = vcmp.lt.s32.totalorder %v127, 37
      %vm142 = vcmp.lt.s32.totalorder %v128, 37
      %vm143 = vcmp.lt.s32.totalorder %v129, 37
      %vm144 = vcmp.lt.s32.totalorder %v130, 37
      %v145 = vmul.u32 %v127, 131
      %v146 = vmul.u32 %v128, 131
      %v147 = vmul.u32 %v129, 131
      %v148 = vmul.u32 %v130, 131
      %v149 = vmul.u32 %v138, 71
      %v150 = vmul.u32 %v139, 71
      %v151 = vmul.u32 %v140, 71
      %v152 = vadd.s32 %v145, %v149
      %v153 = vadd.s32 %v145, %v150
      %v154 = vadd.s32 %v145, %v151
      %v155 = vadd.s32 %v146, %v149
      %v156 = vadd.s32 %v146, %v150
      %v157 = vadd.s32 %v146, %v151
      %v158 = vadd.s32 %v147, %v149
      %v159 = vadd.s32 %v147, %v150
      %v160 = vadd.s32 %v147, %v151
      %v161 = vadd.s32 %v148, %v149
      %v162 = vadd.s32 %v148, %v150
      %v163 = vadd.s32 %v148, %v151
      %v164 = vshra.s32 %v152, 3
      %v165 = vshra.s32 %v153, 3
      %v166 = vshra.s32 %v154, 3
      %v167 = vshra.s32 %v155, 3
      %v168 = vshra.s32 %v156, 3
      %v169 = vshra.s32 %v157, 3
      %v170 = vshra.s32 %v158, 3
      %v171 = vshra.s32 %v159, 3
      %v172 = vshra.s32 %v160, 3
      %v173 = vshra.s32 %v161, 3
      %v174 = vshra.s32 %v162, 3
      %v175 = vshra.s32 %v163, 3
      %v176 = vxor.u32 %v152, %v164
      %v177 = vxor.u32 %v153, %v165
      %v178 = vxor.u32 %v154, %v166
      %v179 = vxor.u32 %v155, %v167
      %v180 = vxor.u32 %v156, %v168
      %v181 = vxor.u32 %v157, %v169
      %v182 = vxor.u32 %v158, %v170
      %v183 = vxor.u32 %v159, %v171
      %v184 = vxor.u32 %v160, %v172
      %v185 = vxor.u32 %v161, %v173
      %v186 = vxor.u32 %v162, %v174
      %v187 = vxor.u32 %v163, %v175
      %v188 = vand.u32 %v176, 15
      %v189 = vand.u32 %v177, 15
      %v190 = vand.u32 %v178, 15
      %v191 = vand.u32 %v179, 15
      %v192 = vand.u32 %v180, 15
      %v193 = vand.u32 %v181, 15
      %v194 = vand.u32 %v182, 15
      %v195 = vand.u32 %v183, 15
      %v196 = vand.u32 %v184, 15
      %v197 = vand.u32 %v185, 15
      %v198 = vand.u32 %v186, 15
      %v199 = vand.u32 %v187, 15
      %vm200 = vcmp.lt.s32.totalorder %v188, 5
      %vm201 = vcmp.lt.s32.totalorder %v189, 5
      %vm202 = vcmp.lt.s32.totalorder %v190, 5
      %vm203 = vcmp.lt.s32.totalorder %v191, 5
      %vm204 = vcmp.lt.s32.totalorder %v192, 5
      %vm205 = vcmp.lt.s32.totalorder %v193, 5
      %vm206 = vcmp.lt.s32.totalorder %v194, 5
      %vm207 = vcmp.lt.s32.totalorder %v195, 5
      %vm208 = vcmp.lt.s32.totalorder %v196, 5
      %vm209 = vcmp.lt.s32.totalorder %v197, 5
      %vm210 = vcmp.lt.s32.totalorder %v198, 5
      %vm211 = vcmp.lt.s32.totalorder %v199, 5
      %vm212 = vmand %vm141, %vm200
      %vm213 = vmand %vm141, %vm201
      %vm214 = vmand %vm141, %vm202
      %vm215 = vmand %vm142, %vm203
      %vm216 = vmand %vm142, %vm204
      %vm217 = vmand %vm142, %vm205
      %vm218 = vmand %vm143, %vm206
      %vm219 = vmand %vm143, %vm207
      %vm220 = vmand %vm143, %vm208
      %vm221 = vmand %vm144, %vm209
      %vm222 = vmand %vm144, %vm210
      %vm223 = vmand %vm144, %vm211
      %v224 = vld [vmem:[%s112] sm:$0xff]
      %v225 = vld [vmem:[%s112 + $0x8] sm:$0xff]
      %v226 = vld [vmem:[%s112 + $0x10] sm:$0xff]
      %v227 = vunpack.c.0.s8 %v224
      %v228 = vunpack.c.0.s8 %v225
      %v229 = vunpack.c.0.s8 %v226
      %v230 = vunpack.c.1.s8 %v224
      %v231 = vunpack.c.1.s8 %v225
      %v232 = vunpack.c.1.s8 %v226
      %v233 = vunpack.c.2.s8 %v224
      %v234 = vunpack.c.2.s8 %v225
      %v235 = vunpack.c.2.s8 %v226
      %v236 = vunpack.c.3.s8 %v224
      %v237 = vunpack.c.3.s8 %v225
      %v238 = vunpack.c.3.s8 %v226
      %v239 = vand.u32 %v227, 255
      %v240 = vand.u32 %v228, 255
      %v241 = vand.u32 %v229, 255
      %v242 = vand.u32 %v230, 255
      %v243 = vand.u32 %v231, 255
      %v244 = vand.u32 %v232, 255
      %v245 = vand.u32 %v233, 255
      %v246 = vand.u32 %v234, 255
      %v247 = vand.u32 %v235, 255
      %v248 = vand.u32 %v236, 255
      %v249 = vand.u32 %v237, 255
      %v250 = vand.u32 %v238, 255
      %v251 = vsel %vm212, 255, %v239
      %v252 = vsel %vm213, 255, %v240
      %v253 = vsel %vm214, 255, %v241
      %v254 = vsel %vm215, 255, %v242
      %v255 = vsel %vm216, 255, %v243
      %v256 = vsel %vm217, 255, %v244
      %v257 = vsel %vm218, 255, %v245
      %v258 = vsel %vm219, 255, %v246
      %v259 = vsel %vm220, 255, %v247
      %v260 = vsel %vm221, 255, %v248
      %v261 = vsel %vm222, 255, %v249
      %v262 = vsel %vm223, 255, %v250
      %v263 = vpack.c.b16 %v252, %v251
      %v264 = vpack.c.b16 %v253, %v253
      %v265 = vpack.c.b8 %v264, %v263
      %v266 = vpack.c.b16 %v255, %v254
      %v267 = vpack.c.b16 %v256, %v256
      %v268 = vpack.c.b8 %v267, %v266
      %v269 = vpack.c.b16 %v258, %v257
      %v270 = vpack.c.b16 %v259, %v259
      %v271 = vpack.c.b8 %v270, %v269
      %v272 = vpack.c.b16 %v261, %v260
      %v273 = vpack.c.b16 %v262, %v262
      %v274 = vpack.c.b8 %v273, %v272
      %275 = vst [vmem:[%s118] sm:$0x3f] %v265
      %276 = vst [vmem:[%s118 + $0x6] sm:$0x3f] %v268
      %277 = vst [vmem:[%s118 + $0xc] sm:$0x3f] %v271
      %278 = vst [vmem:[%s118 + $0x12] sm:$0x3f] %v274
      %s279 = smul.u32 4, %s12
      %p280 = scmp.lt.s32.totalorder %s279, 11
      %s281 = scalar_select %p280, %s279, 11
      %s282 = smul.addr %s281, 3
      %s283 = smul.addr %s282, 2
      %s284 = scalar_lea.vmem %s1, %s283
      // Predicated region
      $region25: #{_lambda_.1} parent=23 // pred_check
        %p285 = pneg %p56
      $region26: #{_lambda_.1} parent=23 // pred_check_branch
        %287 = sbr.rel (%p285) target = $region28
      $region27: #{_lambda_.1} parent=23 // pred_region
        %s288 = smul.u32 4, %s12
      $region28: #{_lambda_.1} parent=23 // pred_fallthru
        _
    $region24: #{_lambda_.1} parent=5 // pred_fallthru
      _
    %p289 = scmp.le.s32.totalorder 2, %s7
    // Predicated region
    $region29: #{_lambda_.1} parent=5 // pred_check
      %p290 = pneg %p289
    $region30: #{_lambda_.1} parent=5 // pred_check_branch
      %292 = sbr.rel (%p290) target = $region32
    $region31: #{_lambda_.1} parent=5 // pred_region
      %s293 = ssub.s32 %s7, 2
      // Predicated region
      $region33: #{_lambda_.1} parent=31 // pred_check
        %p294 = pneg %p62
      $region34: #{_lambda_.1} parent=31 // pred_check_branch
        %296 = sbr.rel (%p294) target = $region36
      $region35: #{_lambda_.1} parent=31 // pred_region
        %s297 = smul.u32 4, %s13
        %p298 = scmp.lt.s32.totalorder %s297, 11
        %s299 = scalar_select %p298, %s297, 11
        %s300 = smul.addr %s299, 3
        %s301 = smul.addr %s300, 2
        %s302 = scalar_lea.vmem %s1, %s301
      $region36: #{_lambda_.1} parent=31 // pred_fallthru
        _
    $region32: #{_lambda_.1} parent=5 // pred_fallthru
      _
  $region6: #{_lambda_.1} parent=0 // loop_footer
    %s11 = sadd.s32 1, %s7
  $region7: #{_lambda_.1} parent=0 // loop_footer_branch
    %6 = sbr.rel target = $region3
  $region8: #{_lambda_.1} parent=0 // loop_exit
    _

</llo_original>
